<compile_context>
chip_gen: v7x
topology: tpu7x:2x2x1
jax: 0.10.0
libtpu: 0.0.40
codegen_flags: <defaults>
</compile_context>

<pallas_src>
import functools

import jax
import jax.numpy as jnp
from jax import lax
from jax.experimental import pallas as pl
from jax.experimental.pallas import tpu as pltpu


def _round_up(x, m):
    return (x + m - 1) // m * m


def _newloss_kernel(z1t_ref, z2_ref, out_ref,
                    g_ref, s1_ref, q1_ref, s2_ref, q2_ref,
                    *, inv_b, mxu_dtype):
    j = pl.program_id(0)                       # feature (output-column) block
    k = pl.program_id(1)                       # batch (reduction) block

    @pl.when(k == 0)
    def _init():
        g_ref[...] = jnp.zeros_like(g_ref)
        s1_ref[...] = jnp.zeros_like(s1_ref)
        q1_ref[...] = jnp.zeros_like(q1_ref)
        s2_ref[...] = jnp.zeros_like(s2_ref)
        q2_ref[...] = jnp.zeros_like(q2_ref)

    z1t = z1t_ref[...]                         # (Dp, TB)  float32
    z2 = z2_ref[...]                           # (TB, TD)  float32

    # Raw cross-Gram of this batch tile on the MXU ((M,K)@(K,N) form).
    # TODO(synk): flip mxu_dtype to bf16 when the accuracy budget allows.
    g_ref[...] += jnp.dot(z1t.astype(mxu_dtype), z2.astype(mxu_dtype),
                          preferred_element_type=jnp.float32)

    # Per-feature running sums / sums of squares (for mean + L2 norm).
    s1_ref[...] += jnp.sum(z1t, axis=1, keepdims=True)           # (Dp, 1)
    q1_ref[...] += jnp.sum(z1t * z1t, axis=1, keepdims=True)     # (Dp, 1)
    s2_ref[...] += jnp.sum(z2, axis=0, keepdims=True)            # (1, TD)
    q2_ref[...] += jnp.sum(z2 * z2, axis=0, keepdims=True)       # (1, TD)

    @pl.when(k == pl.num_programs(1) - 1)
    def _finalize():
        eps2 = jnp.float32(1e-24)              # (1e-12)^2: F.normalize clamp
        inv_n1 = lax.rsqrt(jnp.maximum(q1_ref[...], eps2))        # (Dp, 1)
        inv_n2 = lax.rsqrt(jnp.maximum(q2_ref[...], eps2))        # (1, TD)

        # C = diag(1/||z1_col||) (G - s1 s2^T / B) diag(1/||z2_col||)
        u = s1_ref[...] * inv_n1                                  # (Dp, 1)
        v = s2_ref[...] * inv_n2 * jnp.float32(inv_b)             # (1, TD)
        c = g_ref[...] * inv_n1 * inv_n2 - u * v                  # (Dp, TD)

        # sum(offdiag(C)^2) + sum((diag(C)-1)^2) == sum(C*C) - 2*trace(C) + D
        # ("+ D" and the 1/N scale are applied outside the kernel).
        dp, td = c.shape
        rows = lax.broadcasted_iota(jnp.int32, (dp, td), 0)
        cols = lax.broadcasted_iota(jnp.int32, (dp, td), 1) + j * td
        trace_part = jnp.sum(jnp.where(rows == cols, c, jnp.float32(0.0)))
        partial = jnp.sum(c * c) - jnp.float32(2.0) * trace_part

        # Lane-dense (8,128) store of this feature-block's partial.
        out_ref[...] = jnp.full((8, 128), partial, dtype=jnp.float32)


def new_loss_fn(z1, z2, l4fm1=None, l4fm2=None, *, batch_size,
                temperature=0.5, lambda_loss=1.0,
                block_b=256, block_d=512, use_bf16_mxu=False):
    """Pallas-TPU forward of NewLossFn.

    l4fm1 / l4fm2 / temperature / lambda_loss / mask / BCE criterion are never
    used by the reference forward; kept only for signature parity.
    """
    del l4fm1, l4fm2, temperature, lambda_loss

    b, d = z1.shape
    assert z2.shape == (b, d)
    n = 2 * batch_size

    # Tile sizes: feature tile a multiple of 128 (lane-dense); batch tile a
    # multiple of 8, and a multiple of 128 whenever it is a proper sub-block.
    assert block_d % 128 == 0 and block_b % 128 == 0
    td = min(block_d, _round_up(d, 128))
    d_pad = _round_up(d, td)
    tb = min(block_b, _round_up(b, 8))
    b_pad = _round_up(b, tb)
    n_j = d_pad // td
    n_k = b_pad // tb

    # Zero padding is exact: zero batch rows add nothing to G/s/q, zero
    # feature columns give C == 0 rows/cols, and the "+D" constant below uses
    # the original d.
    z1_t = jnp.pad(z1.astype(jnp.float32).T, ((0, d_pad - d), (0, b_pad - b)))
    z2_p = jnp.pad(z2.astype(jnp.float32), ((0, b_pad - b), (0, d_pad - d)))

    mxu_dtype = jnp.bfloat16 if use_bf16_mxu else jnp.float32
    kernel = functools.partial(_newloss_kernel, inv_b=1.0 / b,
                               mxu_dtype=mxu_dtype)

    # Rough VMEM footprint: double-buffered input tiles + resident
    # accumulators; keep the scoped limit under v7x's 64 MiB physical VMEM.
    vmem_need = 4 * (2 * d_pad * tb + 2 * tb * td + 2 * 8 * 128
                     + d_pad * td + 2 * d_pad * 128 + 2 * 8 * td)
    vmem_limit = int(min(max(vmem_need + (2 << 20), 16 << 20), 64 << 20))

    out = pl.pallas_call(
        kernel,
        grid=(n_j, n_k),
        in_specs=[
            pl.BlockSpec((d_pad, tb), lambda j, k: (0, k)),   # z1^T  (Dp, Bp)
            pl.BlockSpec((tb, td), lambda j, k: (k, j)),      # z2    (Bp, Dp)
        ],
        out_specs=pl.BlockSpec((8, 128), lambda j, k: (0, j)),
        out_shape=jax.ShapeDtypeStruct((8, n_j * 128), jnp.float32),
        scratch_shapes=[
            pltpu.VMEM((d_pad, td), jnp.float32),   # G accumulator
            pltpu.VMEM((d_pad, 1), jnp.float32),    # s1 (col sums of z1)
            pltpu.VMEM((d_pad, 1), jnp.float32),    # q1 (col sumsq of z1)
            pltpu.VMEM((1, td), jnp.float32),       # s2
            pltpu.VMEM((1, td), jnp.float32),       # q2
        ],
        compiler_params=pltpu.CompilerParams(
            dimension_semantics=("parallel", "arbitrary"),
            vmem_limit_bytes=vmem_limit),
    )(z1_t, z2_p)

    partials = out[0, 0::128]                                   # (n_j,)
    return (jnp.sum(partials) + jnp.float32(d)) / jnp.float32(n)


def _reference_loss(z1, z2, batch_size):
    # Pure-JAX mirror of the PyTorch forward, for verification.
    n = 2 * batch_size
    eps = 1e-12
    z1 = z1 / jnp.maximum(jnp.linalg.norm(z1, axis=0, keepdims=True), eps)
    z2 = z2 / jnp.maximum(jnp.linalg.norm(z2, axis=0, keepdims=True), eps)
    z1 = z1 - z1.mean(axis=0, keepdims=True)
    z2 = z2 - z2.mean(axis=0, keepdims=True)
    c = z1.T @ z2
    off = c - jnp.diag(jnp.diag(c))
    loss = jnp.sum(off ** 2) + jnp.sum((jnp.diag(c) - 1.0) ** 2)
    return loss / n


if __name__ == "__main__":
    batch_size = 8
    dim = 32

    key = jax.random.PRNGKey(0)
    k1, k2, k3, k4, k5, k6 = jax.random.split(key, 6)
    z1 = jax.random.normal(k1, (batch_size, dim), dtype=jnp.float32)
    z2 = jax.random.normal(k2, (batch_size, dim), dtype=jnp.float32)
    # Feature maps: unused by the reference forward, present for parity.
    l4fm1 = jax.random.normal(k3, (batch_size, 4, 8, 8), dtype=jnp.float32)
    l4fm2 = jax.random.normal(k4, (batch_size, 4, 8, 8), dtype=jnp.float32)

    loss = new_loss_fn(z1, z2, l4fm1, l4fm2, batch_size=batch_size)
    loss = jax.block_until_ready(loss)
    ref = _reference_loss(z1, z2, batch_size)
    assert jnp.allclose(loss, ref, rtol=1e-5, atol=1e-5), (loss, ref)

    # Second check: ragged shapes exercising the tiled / padded multi-block
    # path (feature-parallel axis, batch streaming, diag offsets, padding).
    b2, d2 = 200, 200
    za = jax.random.normal(k5, (b2, d2), dtype=jnp.float32)
    zb = jax.random.normal(k6, (b2, d2), dtype=jnp.float32)
    loss2 = new_loss_fn(za, zb, batch_size=b2, block_b=128, block_d=128)
    loss2 = jax.block_until_ready(loss2)
    ref2 = _reference_loss(za, zb, b2)
    assert jnp.allclose(loss2, ref2, rtol=1e-4, atol=1e-4), (loss2, ref2)

    print("KERNEL_OK")
</pallas_src>

<mosaic_0001>
module attributes {stable_mosaic.version = 11 : i64} {
  func.func @_newloss_kernel(%arg0: i32, %arg1: i32, %arg2: memref<128x8xf32, #tpu.memory_space<vmem>>, %arg3: memref<8x128xf32, #tpu.memory_space<vmem>>, %arg4: memref<8x128xf32, #tpu.memory_space<vmem>>, %arg5: memref<128x128xf32, #tpu.memory_space<vmem>>, %arg6: memref<128x1xf32, #tpu.memory_space<vmem>>, %arg7: memref<128x1xf32, #tpu.memory_space<vmem>>, %arg8: memref<1x128xf32, #tpu.memory_space<vmem>>, %arg9: memref<1x128xf32, #tpu.memory_space<vmem>>) attributes {dimension_semantics = [#tpu.dimension_semantics<parallel>, #tpu.dimension_semantics<arbitrary>], iteration_bounds = array<i64: 1, 1>, scalar_prefetch = 0 : i64, scratch_operands = 5 : i64, tpu.core_type = #tpu.core_type<tc>, window_params = [{transform_indices = @transform_0, window_bounds = array<i64: 128, 8>}, {transform_indices = @transform_1, window_bounds = array<i64: 8, 128>}, {transform_indices = @transform_2, window_bounds = array<i64: 8, 128>}]} {
    %c0_i32 = arith.constant 0 : i32
    %0 = arith.cmpi eq, %arg1, %c0_i32 : i32
    %1 = arith.extui %0 : i1 to i32
    %c0_i32_0 = arith.constant 0 : i32
    %2 = arith.cmpi ne, %1, %c0_i32_0 : i32
    scf.if %2 {
      %cst_30 = arith.constant 0.000000e+00 : f32
      %34 = vector.broadcast %cst_30 : f32 to vector<128x128xf32>
      %c0_31 = arith.constant 0 : index
      %c0_32 = arith.constant 0 : index
      %35 = vector.load %arg5[%c0_31, %c0_32] : memref<128x128xf32, #tpu.memory_space<vmem>>, vector<128x128xf32>
      tpu.vector_store %arg5[%c0_31, %c0_32], %34 {strides = array<i32>} : memref<128x128xf32, #tpu.memory_space<vmem>>, vector<128x128xf32>,
      %cst_33 = arith.constant 0.000000e+00 : f32
      %36 = vector.broadcast %cst_33 : f32 to vector<128x1xf32>
      %c0_34 = arith.constant 0 : index
      %c0_35 = arith.constant 0 : index
      %37 = vector.load %arg6[%c0_34, %c0_35] : memref<128x1xf32, #tpu.memory_space<vmem>>, vector<128x1xf32>
      tpu.vector_store %arg6[%c0_34, %c0_35], %36 {strides = array<i32>} : memref<128x1xf32, #tpu.memory_space<vmem>>, vector<128x1xf32>,
      %cst_36 = arith.constant 0.000000e+00 : f32
      %38 = vector.broadcast %cst_36 : f32 to vector<128x1xf32>
      %c0_37 = arith.constant 0 : index
      %c0_38 = arith.constant 0 : index
      %39 = vector.load %arg7[%c0_37, %c0_38] : memref<128x1xf32, #tpu.memory_space<vmem>>, vector<128x1xf32>
      tpu.vector_store %arg7[%c0_37, %c0_38], %38 {strides = array<i32>} : memref<128x1xf32, #tpu.memory_space<vmem>>, vector<128x1xf32>,
      %cst_39 = arith.constant 0.000000e+00 : f32
      %40 = vector.broadcast %cst_39 : f32 to vector<1x128xf32>
      %c0_40 = arith.constant 0 : index
      %c0_41 = arith.constant 0 : index
      %41 = vector.load %arg8[%c0_40, %c0_41] : memref<1x128xf32, #tpu.memory_space<vmem>>, vector<1x128xf32>
      tpu.vector_store %arg8[%c0_40, %c0_41], %40 {strides = array<i32>} : memref<1x128xf32, #tpu.memory_space<vmem>>, vector<1x128xf32>,
      %cst_42 = arith.constant 0.000000e+00 : f32
      %42 = vector.broadcast %cst_42 : f32 to vector<1x128xf32>
      %c0_43 = arith.constant 0 : index
      %c0_44 = arith.constant 0 : index
      %43 = vector.load %arg9[%c0_43, %c0_44] : memref<1x128xf32, #tpu.memory_space<vmem>>, vector<1x128xf32>
      tpu.vector_store %arg9[%c0_43, %c0_44], %42 {strides = array<i32>} : memref<1x128xf32, #tpu.memory_space<vmem>>, vector<1x128xf32>,
    } else {
    }
    %c0 = arith.constant 0 : index
    %c0_1 = arith.constant 0 : index
    %3 = vector.load %arg2[%c0, %c0_1] : memref<128x8xf32, #tpu.memory_space<vmem>>, vector<128x8xf32>
    %c0_2 = arith.constant 0 : index
    %c0_3 = arith.constant 0 : index
    %4 = vector.load %arg3[%c0_2, %c0_3] : memref<8x128xf32, #tpu.memory_space<vmem>>, vector<8x128xf32>
    %c0_4 = arith.constant 0 : index
    %c0_5 = arith.constant 0 : index
    %5 = vector.load %arg5[%c0_4, %c0_5] : memref<128x128xf32, #tpu.memory_space<vmem>>, vector<128x128xf32>
    %cst = arith.constant dense<0.000000e+00> : vector<128x128xf32>
    %6 = tpu.matmul %3, %4, %cst {dimension_numbers = #tpu.dot_dimension_numbers<[1], [0], [0], [1], [0, 0, 1, 1], [], []>} : vector<128x8xf32>, vector<8x128xf32>, vector<128x128xf32> -> vector<128x128xf32>
    %7 = arith.addf %5, %6 : vector<128x128xf32>
    %c0_6 = arith.constant 0 : index
    %c0_7 = arith.constant 0 : index
    %8 = vector.load %arg5[%c0_6, %c0_7] : memref<128x128xf32, #tpu.memory_space<vmem>>, vector<128x128xf32>
    tpu.vector_store %arg5[%c0_6, %c0_7], %7 {strides = array<i32>} : memref<128x128xf32, #tpu.memory_space<vmem>>, vector<128x128xf32>,
    %c0_8 = arith.constant 0 : index
    %c0_9 = arith.constant 0 : index
    %9 = vector.load %arg6[%c0_8, %c0_9] : memref<128x1xf32, #tpu.memory_space<vmem>>, vector<128x1xf32>
    %cst_10 = arith.constant dense<0.000000e+00> : vector<128xf32>
    %10 = vector.multi_reduction <add>, %3, %cst_10 [1] : vector<128x8xf32> to vector<128xf32>
    %11 = vector.shape_cast %10 : vector<128xf32> to vector<128x1xf32>
    %12 = arith.addf %9, %11 : vector<128x1xf32>
    %c0_11 = arith.constant 0 : index
    %c0_12 = arith.constant 0 : index
    %13 = vector.load %arg6[%c0_11, %c0_12] : memref<128x1xf32, #tpu.memory_space<vmem>>, vector<128x1xf32>
    tpu.vector_store %arg6[%c0_11, %c0_12], %12 {strides = array<i32>} : memref<128x1xf32, #tpu.memory_space<vmem>>, vector<128x1xf32>,
    %c0_13 = arith.constant 0 : index
    %c0_14 = arith.constant 0 : index
    %14 = vector.load %arg7[%c0_13, %c0_14] : memref<128x1xf32, #tpu.memory_space<vmem>>, vector<128x1xf32>
    %15 = arith.mulf %3, %3 : vector<128x8xf32>
    %cst_15 = arith.constant dense<0.000000e+00> : vector<128xf32>
    %16 = vector.multi_reduction <add>, %15, %cst_15 [1] : vector<128x8xf32> to vector<128xf32>
    %17 = vector.shape_cast %16 : vector<128xf32> to vector<128x1xf32>
    %18 = arith.addf %14, %17 : vector<128x1xf32>
    %c0_16 = arith.constant 0 : index
    %c0_17 = arith.constant 0 : index
    %19 = vector.load %arg7[%c0_16, %c0_17] : memref<128x1xf32, #tpu.memory_space<vmem>>, vector<128x1xf32>
    tpu.vector_store %arg7[%c0_16, %c0_17], %18 {strides = array<i32>} : memref<128x1xf32, #tpu.memory_space<vmem>>, vector<128x1xf32>,
    %c0_18 = arith.constant 0 : index
    %c0_19 = arith.constant 0 : index
    %20 = vector.load %arg8[%c0_18, %c0_19] : memref<1x128xf32, #tpu.memory_space<vmem>>, vector<1x128xf32>
    %cst_20 = arith.constant dense<0.000000e+00> : vector<128xf32>
    %21 = vector.multi_reduction <add>, %4, %cst_20 [0] : vector<8x128xf32> to vector<128xf32>
    %22 = vector.shape_cast %21 : vector<128xf32> to vector<1x128xf32>
    %23 = arith.addf %20, %22 : vector<1x128xf32>
    %c0_21 = arith.constant 0 : index
    %c0_22 = arith.constant 0 : index
    %24 = vector.load %arg8[%c0_21, %c0_22] : memref<1x128xf32, #tpu.memory_space<vmem>>, vector<1x128xf32>
    tpu.vector_store %arg8[%c0_21, %c0_22], %23 {strides = array<i32>} : memref<1x128xf32, #tpu.memory_space<vmem>>, vector<1x128xf32>,
    %c0_23 = arith.constant 0 : index
    %c0_24 = arith.constant 0 : index
    %25 = vector.load %arg9[%c0_23, %c0_24] : memref<1x128xf32, #tpu.memory_space<vmem>>, vector<1x128xf32>
    %26 = arith.mulf %4, %4 : vector<8x128xf32>
    %cst_25 = arith.constant dense<0.000000e+00> : vector<128xf32>
    %27 = vector.multi_reduction <add>, %26, %cst_25 [0] : vector<8x128xf32> to vector<128xf32>
    %28 = vector.shape_cast %27 : vector<128xf32> to vector<1x128xf32>
    %29 = arith.addf %25, %28 : vector<1x128xf32>
    %c0_26 = arith.constant 0 : index
    %c0_27 = arith.constant 0 : index
    %30 = vector.load %arg9[%c0_26, %c0_27] : memref<1x128xf32, #tpu.memory_space<vmem>>, vector<1x128xf32>
    tpu.vector_store %arg9[%c0_26, %c0_27], %29 {strides = array<i32>} : memref<1x128xf32, #tpu.memory_space<vmem>>, vector<1x128xf32>,
    %c0_i32_28 = arith.constant 0 : i32
    %31 = arith.cmpi eq, %arg1, %c0_i32_28 : i32
    %32 = arith.extui %31 : i1 to i32
    %c0_i32_29 = arith.constant 0 : i32
    %33 = arith.cmpi ne, %32, %c0_i32_29 : i32
    scf.if %33 {
      %c0_30 = arith.constant 0 : index
      %c0_31 = arith.constant 0 : index
      %34 = vector.load %arg7[%c0_30, %c0_31] : memref<128x1xf32, #tpu.memory_space<vmem>>, vector<128x1xf32>
      %cst_32 = arith.constant 1.000000e-24 : f32
      %35 = vector.broadcast %cst_32 : f32 to vector<128x1xf32>
      %36 = arith.maximumf %34, %35 : vector<128x1xf32>
      %37 = math.rsqrt %36 : vector<128x1xf32>
      %c0_33 = arith.constant 0 : index
      %c0_34 = arith.constant 0 : index
      %38 = vector.load %arg9[%c0_33, %c0_34] : memref<1x128xf32, #tpu.memory_space<vmem>>, vector<1x128xf32>
      %cst_35 = arith.constant 1.000000e-24 : f32
      %39 = vector.broadcast %cst_35 : f32 to vector<1x128xf32>
      %40 = arith.maximumf %38, %39 : vector<1x128xf32>
      %41 = math.rsqrt %40 : vector<1x128xf32>
      %c0_36 = arith.constant 0 : index
      %c0_37 = arith.constant 0 : index
      %42 = vector.load %arg6[%c0_36, %c0_37] : memref<128x1xf32, #tpu.memory_space<vmem>>, vector<128x1xf32>
      %43 = arith.mulf %42, %37 : vector<128x1xf32>
      %c0_38 = arith.constant 0 : index
      %c0_39 = arith.constant 0 : index
      %44 = vector.load %arg8[%c0_38, %c0_39] : memref<1x128xf32, #tpu.memory_space<vmem>>, vector<1x128xf32>
      %45 = arith.mulf %44, %41 : vector<1x128xf32>
      %cst_40 = arith.constant 1.250000e-01 : f32
      %46 = vector.broadcast %cst_40 : f32 to vector<1x128xf32>
      %47 = arith.mulf %45, %46 : vector<1x128xf32>
      %c0_41 = arith.constant 0 : index
      %c0_42 = arith.constant 0 : index
      %48 = vector.load %arg5[%c0_41, %c0_42] : memref<128x128xf32, #tpu.memory_space<vmem>>, vector<128x128xf32>
      %49 = vector.broadcast %37 : vector<128x1xf32> to vector<128x128xf32>
      %50 = arith.mulf %48, %49 : vector<128x128xf32>
      %51 = vector.broadcast %41 : vector<1x128xf32> to vector<128x128xf32>
      %52 = arith.mulf %50, %51 : vector<128x128xf32>
      %53 = vector.broadcast %43 : vector<128x1xf32> to vector<128x128xf32>
      %54 = vector.broadcast %47 : vector<1x128xf32> to vector<128x128xf32>
      %55 = arith.mulf %53, %54 : vector<128x128xf32>
      %56 = arith.subf %52, %55 : vector<128x128xf32>
      %57 = tpu.iota {dimensions = array<i32: 0>} : vector<128x128xi32>
      %58 = tpu.iota {dimensions = array<i32: 1>} : vector<128x128xi32>
      %c128_i32 = arith.constant 128 : i32
      %59 = arith.muli %arg0, %c128_i32 : i32
      %60 = vector.broadcast %59 : i32 to vector<128x128xi32>
      %61 = arith.addi %58, %60 : vector<128x128xi32>
      %62 = arith.cmpi eq, %57, %61 : vector<128x128xi32>
      %cst_43 = arith.constant 0.000000e+00 : f32
      %63 = vector.broadcast %cst_43 : f32 to vector<128x128xf32>
      %64 = arith.select %62, %56, %63 : vector<128x128xi1>, vector<128x128xf32>
      %65 = vector.shape_cast %64 : vector<128x128xf32> to vector<1x128x128xf32>
      %cst_44 = arith.constant dense<0.000000e+00> : vector<1xf32>
      %66 = vector.multi_reduction <add>, %65, %cst_44 [1, 2] : vector<1x128x128xf32> to vector<1xf32>
      %67 = vector.shape_cast %66 : vector<1xf32> to vector<1x1x1xf32>
      %68 = vector.extract %67[0, 0, 0] : f32 from vector<1x1x1xf32>
      %69 = arith.mulf %56, %56 : vector<128x128xf32>
      %70 = vector.shape_cast %69 : vector<128x128xf32> to vector<1x128x128xf32>
      %cst_45 = arith.constant dense<0.000000e+00> : vector<1xf32>
      %71 = vector.multi_reduction <add>, %70, %cst_45 [1, 2] : vector<1x128x128xf32> to vector<1xf32>
      %72 = vector.shape_cast %71 : vector<1xf32> to vector<1x1x1xf32>
      %73 = vector.extract %72[0, 0, 0] : f32 from vector<1x1x1xf32>
      %cst_46 = arith.constant 2.000000e+00 : f32
      %74 = arith.mulf %cst_46, %68 : f32
      %75 = arith.subf %73, %74 : f32
      %76 = vector.broadcast %75 : f32 to vector<8x128xf32>
      %c0_47 = arith.constant 0 : index
      %c0_48 = arith.constant 0 : index
      %77 = vector.load %arg4[%c0_47, %c0_48] : memref<8x128xf32, #tpu.memory_space<vmem>>, vector<8x128xf32>
      tpu.vector_store %arg4[%c0_47, %c0_48], %76 {strides = array<i32>} : memref<8x128xf32, #tpu.memory_space<vmem>>, vector<8x128xf32>,
    } else {
    }
    return
  }
  func.func @transform_0(%arg0: i32, %arg1: i32) -> (i32, i32) {
    %c0_i32 = arith.constant 0 : i32
    %c0_i32_0 = arith.constant 0 : i32
    return %c0_i32, %arg1 : i32, i32
  }
  func.func @transform_1(%arg0: i32, %arg1: i32) -> (i32, i32) {
    %c0_i32 = arith.constant 0 : i32
    return %arg1, %arg0 : i32, i32
  }
  func.func @transform_2(%arg0: i32, %arg1: i32) -> (i32, i32) {
    %c0_i32 = arith.constant 0 : i32
    %c0_i32_0 = arith.constant 0 : i32
    return %c0_i32, %arg0 : i32, i32
  }
}

</mosaic_0001>

<llo_original>
// kernel: tpu_custom_call.1
$region0: #{tpu_custom_call.1}
  #allocation0 [shape = 'u32[]', space=smem, size = 0x4, offset = 0x4, fixed_abs, tag = 'smem constant byte address 0x4 - core index']
  #allocation1 [shape = 'u32[144,128]{1,0:T(1,128)}', space=vmem, size = 0x12000, scoped, tag = 'internal scratch']
  #allocation2 [shape = 'f32[128,128]{1,0:T(8,128)}', space=vmem, size = 0x10000, scoped, tag = 'scratch operand']
  #allocation3 [shape = 'f32[128,1]{1,0:T(8,128)}', space=vmem, size = 0x10000, scoped, tag = 'scratch operand']
  #allocation4 [shape = 'f32[128,1]{1,0:T(8,128)}', space=vmem, size = 0x10000, scoped, tag = 'scratch operand']
  #allocation5 [shape = 'f32[1,128]{1,0:T(1,128)}', space=vmem, size = 0x200, scoped, tag = 'scratch operand']
  #allocation6 [shape = 'f32[1,128]{1,0:T(1,128)}', space=vmem, size = 0x200, scoped, tag = 'scratch operand']
  %s0 = inlined_call_operand.vmem [shape: f32[128,8], index: 0, kind: input, shape index: {}]
  %s1 = inlined_call_operand.vmem [shape: f32[8,128], index: 1, kind: input, shape index: {}]
  %s2 = inlined_call_operand.hbm [shape: f32[8,128], index: 2, kind: output, shape index: {}]
  %s3 = sld [smem:[#allocation0]]
  $region26: #{tpu_custom_call.1} parent=0
    _
  %s5 = ssub.s32 1, %s3
  %s6 = scalar_select 0, %s5, %s3
  $region1: #{tpu_custom_call.1} parent=0
    #allocation7 [shape = 'u8[4096]{0}', space=vmem, size = 0x1000, scoped, tag = 'output window, operand 0, single buffered']
    #allocation8 [shape = 's32[1]{0}', space=sflag, size = 0x4, scoped, tag = 'scoped memory for tpu_custom_call.1']
    %7 = vsyncpa [#allocation8], 0
    // Predicated region
    $region2: #{tpu_custom_call.1} parent=1 // pred_check
      _
    $region3: #{tpu_custom_call.1} parent=1 // pred_check_branch
      %9 = sbr.rel (0) target = $region5
    $region4: #{tpu_custom_call.1} parent=1 // pred_region
      _
    $region5: #{tpu_custom_call.1} parent=1 // pred_fallthru
      _
    // Predicated region
    $region6: #{tpu_custom_call.1} parent=1 // pred_check
      _
    $region7: #{tpu_custom_call.1} parent=1 // pred_check_branch
      %11 = sbr.rel (0) target = $region9
    $region8: #{tpu_custom_call.1} parent=1 // pred_region
      _
    $region9: #{tpu_custom_call.1} parent=1 // pred_fallthru
      _
    %p12 = scmp.eq.s32.totalorder 0, 0
    // Predicated region
    $region10: #{tpu_custom_call.1} parent=1 // pred_check
      %p13 = pneg %p12
    $region11: #{tpu_custom_call.1} parent=1 // pred_check_branch
      %15 = sbr.rel (%p13) target = $region13
    $region12: #{tpu_custom_call.1} parent=1 // pred_region
      %16 = vst [vmem:[#allocation2] sm:$0xff] 0.0
      %17 = vst [vmem:[#allocation2 + $0x8] sm:$0xff] 0.0
      %18 = vst [vmem:[#allocation2 + $0x10] sm:$0xff] 0.0
      %19 = vst [vmem:[#allocation2 + $0x18] sm:$0xff] 0.0
      %20 = vst [vmem:[#allocation2 + $0x20] sm:$0xff] 0.0
      %21 = vst [vmem:[#allocation2 + $0x28] sm:$0xff] 0.0
      %22 = vst [vmem:[#allocation2 + $0x30] sm:$0xff] 0.0
      %23 = vst [vmem:[#allocation2 + $0x38] sm:$0xff] 0.0
      %24 = vst [vmem:[#allocation2 + $0x40] sm:$0xff] 0.0
      %25 = vst [vmem:[#allocation2 + $0x48] sm:$0xff] 0.0
      %26 = vst [vmem:[#allocation2 + $0x50] sm:$0xff] 0.0
      %27 = vst [vmem:[#allocation2 + $0x58] sm:$0xff] 0.0
      %28 = vst [vmem:[#allocation2 + $0x60] sm:$0xff] 0.0
      %29 = vst [vmem:[#allocation2 + $0x68] sm:$0xff] 0.0
      %30 = vst [vmem:[#allocation2 + $0x70] sm:$0xff] 0.0
      %31 = vst [vmem:[#allocation2 + $0x78] sm:$0xff] 0.0
      %vm32 = vcmask 7168
      %33 = vst.msk [vmem:[#allocation3] sm:$0xff] %vm32, 0.0
      %34 = vst.msk [vmem:[#allocation3 + $0x8] sm:$0xff] %vm32, 0.0
      %35 = vst.msk [vmem:[#allocation3 + $0x10] sm:$0xff] %vm32, 0.0
      %36 = vst.msk [vmem:[#allocation3 + $0x18] sm:$0xff] %vm32, 0.0
      %37 = vst.msk [vmem:[#allocation3 + $0x20] sm:$0xff] %vm32, 0.0
      %38 = vst.msk [vmem:[#allocation3 + $0x28] sm:$0xff] %vm32, 0.0
      %39 = vst.msk [vmem:[#allocation3 + $0x30] sm:$0xff] %vm32, 0.0
      %40 = vst.msk [vmem:[#allocation3 + $0x38] sm:$0xff] %vm32, 0.0
      %41 = vst.msk [vmem:[#allocation3 + $0x40] sm:$0xff] %vm32, 0.0
      %42 = vst.msk [vmem:[#allocation3 + $0x48] sm:$0xff] %vm32, 0.0
      %43 = vst.msk [vmem:[#allocation3 + $0x50] sm:$0xff] %vm32, 0.0
      %44 = vst.msk [vmem:[#allocation3 + $0x58] sm:$0xff] %vm32, 0.0
      %45 = vst.msk [vmem:[#allocation3 + $0x60] sm:$0xff] %vm32, 0.0
      %46 = vst.msk [vmem:[#allocation3 + $0x68] sm:$0xff] %vm32, 0.0
      %47 = vst.msk [vmem:[#allocation3 + $0x70] sm:$0xff] %vm32, 0.0
      %48 = vst.msk [vmem:[#allocation3 + $0x78] sm:$0xff] %vm32, 0.0
      %49 = vst.msk [vmem:[#allocation4] sm:$0xff] %vm32, 0.0
      %50 = vst.msk [vmem:[#allocation4 + $0x8] sm:$0xff] %vm32, 0.0
      %51 = vst.msk [vmem:[#allocation4 + $0x10] sm:$0xff] %vm32, 0.0
      %52 = vst.msk [vmem:[#allocation4 + $0x18] sm:$0xff] %vm32, 0.0
      %53 = vst.msk [vmem:[#allocation4 + $0x20] sm:$0xff] %vm32, 0.0
      %54 = vst.msk [vmem:[#allocation4 + $0x28] sm:$0xff] %vm32, 0.0
      %55 = vst.msk [vmem:[#allocation4 + $0x30] sm:$0xff] %vm32, 0.0
      %56 = vst.msk [vmem:[#allocation4 + $0x38] sm:$0xff] %vm32, 0.0
      %57 = vst.msk [vmem:[#allocation4 + $0x40] sm:$0xff] %vm32, 0.0
      %58 = vst.msk [vmem:[#allocation4 + $0x48] sm:$0xff] %vm32, 0.0
      %59 = vst.msk [vmem:[#allocation4 + $0x50] sm:$0xff] %vm32, 0.0
      %60 = vst.msk [vmem:[#allocation4 + $0x58] sm:$0xff] %vm32, 0.0
      %61 = vst.msk [vmem:[#allocation4 + $0x60] sm:$0xff] %vm32, 0.0
      %62 = vst.msk [vmem:[#allocation4 + $0x68] sm:$0xff] %vm32, 0.0
      %63 = vst.msk [vmem:[#allocation4 + $0x70] sm:$0xff] %vm32, 0.0
      %64 = vst.msk [vmem:[#allocation4 + $0x78] sm:$0xff] %vm32, 0.0
      %65 = vst [vmem:[#allocation5] sm:$0x1] 0.0
      %66 = vst [vmem:[#allocation6] sm:$0x1] 0.0
    $region13: #{tpu_custom_call.1} parent=1 // pred_fallthru
      _
    %v67 = vld [vmem:[%s0] sm:$0xff]
    %v68 = vld [vmem:[%s0 + $0x8] sm:$0xff]
    %v69 = vld [vmem:[%s0 + $0x10] sm:$0xff]
    %v70 = vld [vmem:[%s0 + $0x18] sm:$0xff]
    %v71 = vld [vmem:[%s0 + $0x20] sm:$0xff]
    %v72 = vld [vmem:[%s0 + $0x28] sm:$0xff]
    %v73 = vld [vmem:[%s0 + $0x30] sm:$0xff]
    %v74 = vld [vmem:[%s0 + $0x38] sm:$0xff]
    %v75 = vld [vmem:[%s0 + $0x40] sm:$0xff]
    %v76 = vld [vmem:[%s0 + $0x48] sm:$0xff]
    %v77 = vld [vmem:[%s0 + $0x50] sm:$0xff]
    %v78 = vld [vmem:[%s0 + $0x58] sm:$0xff]
    %v79 = vld [vmem:[%s0 + $0x60] sm:$0xff]
    %v80 = vld [vmem:[%s0 + $0x68] sm:$0xff]
    %v81 = vld [vmem:[%s0 + $0x70] sm:$0xff]
    %v82 = vld [vmem:[%s0 + $0x78] sm:$0xff]
    %v83 = vld [vmem:[%s1] sm:$0xff]
    %v84 = vld [vmem:[#allocation2] sm:$0xff]
    %v85 = vld [vmem:[#allocation2 + $0x8] sm:$0xff]
    %v86 = vld [vmem:[#allocation2 + $0x10] sm:$0xff]
    %v87 = vld [vmem:[#allocation2 + $0x18] sm:$0xff]
    %v88 = vld [vmem:[#allocation2 + $0x20] sm:$0xff]
    %v89 = vld [vmem:[#allocation2 + $0x28] sm:$0xff]
    %v90 = vld [vmem:[#allocation2 + $0x30] sm:$0xff]
    %v91 = vld [vmem:[#allocation2 + $0x38] sm:$0xff]
    %v92 = vld [vmem:[#allocation2 + $0x40] sm:$0xff]
    %v93 = vld [vmem:[#allocation2 + $0x48] sm:$0xff]
    %v94 = vld [vmem:[#allocation2 + $0x50] sm:$0xff]
    %v95 = vld [vmem:[#allocation2 + $0x58] sm:$0xff]
    %v96 = vld [vmem:[#allocation2 + $0x60] sm:$0xff]
    %v97 = vld [vmem:[#allocation2 + $0x68] sm:$0xff]
    %v98 = vld [vmem:[#allocation2 + $0x70] sm:$0xff]
    %v99 = vld [vmem:[#allocation2 + $0x78] sm:$0xff]
    %vm100 = vcmask 64512
    %v102 = vsel %vm100, %v67, 0
    %v105 = vsel %vm100, %v68, 0
    %v108 = vsel %vm100, %v69, 0
    %v111 = vsel %vm100, %v70, 0
    %v114 = vsel %vm100, %v71, 0
    %v117 = vsel %vm100, %v72, 0
    %v120 = vsel %vm100, %v73, 0
    %v123 = vsel %vm100, %v74, 0
    %v126 = vsel %vm100, %v75, 0
    %v129 = vsel %vm100, %v76, 0
    %v132 = vsel %vm100, %v77, 0
    %v135 = vsel %vm100, %v78, 0
    %v138 = vsel %vm100, %v79, 0
    %v141 = vsel %vm100, %v80, 0
    %v144 = vsel %vm100, %v81, 0
    %v147 = vsel %vm100, %v82, 0
    %149 = vmatprep.subr.mxu0 0.0
    %150 = vmatpush1.msra.mxu0 %v83
    %151 = vmatprep.subr.mxu0 0.0
    %152 = vmatpush1.msra.mxu0 0.0
    %153 = vmatprep.subr.mxu0 0.0
    %154 = vmatpush1.msra.mxu0 0.0
    %155 = vmatprep.subr.mxu0 0.0
    %156 = vmatpush1.msra.mxu0 0.0
    %157 = vmatprep.subr.mxu0 0.0
    %158 = vmatpush1.msra.mxu0 0.0
    %159 = vmatprep.subr.mxu0 0.0
    %160 = vmatpush1.msra.mxu0 0.0
    %161 = vmatprep.subr.mxu0 0.0
    %162 = vmatpush1.msra.mxu0 0.0
    %163 = vmatprep.subr.mxu0 0.0
    %164 = vmatpush1.msra.mxu0 0.0
    %165 = vmatprep.subr.mxu0 0.0
    %166 = vmatpush1.msra.mxu0 0.0
    %167 = vmatprep.subr.mxu0 0.0
    %168 = vmatpush1.msra.mxu0 0.0
    %169 = vmatprep.subr.mxu0 0.0
    %170 = vmatpush1.msra.mxu0 0.0
    %171 = vmatprep.subr.mxu0 0.0
    %172 = vmatpush1.msra.mxu0 0.0
    %173 = vmatprep.subr.mxu0 0.0
    %174 = vmatpush1.msra.mxu0 0.0
    %175 = vmatprep.subr.mxu0 0.0
    %176 = vmatpush1.msra.mxu0 0.0
    %177 = vmatprep.subr.mxu0 0.0
    %178 = vmatpush1.msra.mxu0 0.0
    %179 = vmatprep.subr.mxu0 0.0
    %180 = vmatpush1.msra.mxu0 0.0
    %181 = vmatprep.subr.mxu0 0.0
    %182 = vmatpush1.msra.mxu0 0.0
    %183 = vmatprep.subr.mxu0 0.0
    %184 = vmatpush1.msra.mxu0 0.0
    %185 = vmatprep.subr.mxu0 0.0
    %186 = vmatpush1.msra.mxu0 0.0
    %187 = vmatprep.subr.mxu0 0.0
    %188 = vmatpush1.msra.mxu0 0.0
    %189 = vmatprep.subr.mxu0 0.0
    %190 = vmatpush1.msra.mxu0 0.0
    %191 = vmatprep.subr.mxu0 0.0
    %192 = vmatpush1.msra.mxu0 0.0
    %193 = vmatprep.subr.mxu0 0.0
    %194 = vmatpush1.msra.mxu0 0.0
    %195 = vmatprep.subr.mxu0 0.0
    %196 = vmatpush1.msra.mxu0 0.0
    %197 = vmatprep.subr.mxu0 0.0
    %198 = vmatpush1.msra.mxu0 0.0
    %199 = vmatprep.subr.mxu0 0.0
    %200 = vmatpush1.msra.mxu0 0.0
    %201 = vmatprep.subr.mxu0 0.0
    %202 = vmatpush1.msra.mxu0 0.0
    %203 = vmatprep.subr.mxu0 0.0
    %204 = vmatpush1.msra.mxu0 0.0
    %205 = vmatprep.subr.mxu0 0.0
    %206 = vmatpush1.msra.mxu0 0.0
    %207 = vmatprep.subr.mxu0 0.0
    %208 = vmatpush1.msra.mxu0 0.0
    %209 = vmatprep.subr.mxu0 0.0
    %210 = vmatpush1.msra.mxu0 0.0
    %211 = vmatprep.subr.mxu0 0.0
    %212 = vmatpush1.msra.mxu0 0.0
    %213 = vmatprep.mubr.f32.mxu0 0.0
    %214 = vmatmul.mubr.f32.gmra.mrb[0].mxu0 %v102
    %v215 = vpop.f32.mrb[0].mxu0
    %v216 = vadd.f32 0.0, %v215
    %v217 = vpop.f32.mrb[0].mxu0
    %218 = vmatprep.mubr.f32.mxu0 0.0
    %219 = vmatmul.mubr.f32.gmra.mrb[0].mxu0 %v105
    %v220 = vpop.f32.mrb[0].mxu0
    %v221 = vadd.f32 0.0, %v220
    %v222 = vpop.f32.mrb[0].mxu0
    %223 = vmatprep.mubr.f32.mxu0 0.0
    %224 = vmatmul.mubr.f32.gmra.mrb[0].mxu0 %v108
    %v225 = vpop.f32.mrb[0].mxu0
    %v226 = vadd.f32 0.0, %v225
    %v227 = vpop.f32.mrb[0].mxu0
    %228 = vmatprep.mubr.f32.mxu0 0.0
    %229 = vmatmul.mubr.f32.gmra.mrb[0].mxu0 %v111
    %v230 = vpop.f32.mrb[0].mxu0
    %v231 = vadd.f32 0.0, %v230
    %v232 = vpop.f32.mrb[0].mxu0
    %233 = vmatprep.mubr.f32.mxu0 0.0
    %234 = vmatmul.mubr.f32.gmra.mrb[0].mxu0 %v114
    %v235 = vpop.f32.mrb[0].mxu0
    %v236 = vadd.f32 0.0, %v235
    %v237 = vpop.f32.mrb[0].mxu0
    %238 = vmatprep.mubr.f32.mxu0 0.0
    %239 = vmatmul.mubr.f32.gmra.mrb[0].mxu0 %v117
    %v240 = vpop.f32.mrb[0].mxu0
    %v241 = vadd.f32 0.0, %v240
    %v242 = vpop.f32.mrb[0].mxu0
    %243 = vmatprep.mubr.f32.mxu0 0.0
    %244 = vmatmul.mubr.f32.gmra.mrb[0].mxu0 %v120
    %v245 = vpop.f32.mrb[0].mxu0
    %v246 = vadd.f32 0.0, %v245
    %v247 = vpop.f32.mrb[0].mxu0
    %248 = vmatprep.mubr.f32.mxu0 0.0
    %249 = vmatmul.mubr.f32.gmra.mrb[0].mxu0 %v123
    %v250 = vpop.f32.mrb[0].mxu0
    %v251 = vadd.f32 0.0, %v250
    %v252 = vpop.f32.mrb[0].mxu0
    %253 = vmatprep.mubr.f32.mxu0 0.0
    %254 = vmatmul.mubr.f32.gmra.mrb[0].mxu0 %v126
    %v255 = vpop.f32.mrb[0].mxu0
    %v256 = vadd.f32 0.0, %v255
    %v257 = vpop.f32.mrb[0].mxu0
    %258 = vmatprep.mubr.f32.mxu0 0.0
    %259 = vmatmul.mubr.f32.gmra.mrb[0].mxu0 %v129
    %v260 = vpop.f32.mrb[0].mxu0
    %v261 = vadd.f32 0.0, %v260
    %v262 = vpop.f32.mrb[0].mxu0
    %263 = vmatprep.mubr.f32.mxu0 0.0
    %264 = vmatmul.mubr.f32.gmra.mrb[0].mxu0 %v132
    %v265 = vpop.f32.mrb[0].mxu0
    %v266 = vadd.f32 0.0, %v265
    %v267 = vpop.f32.mrb[0].mxu0
    %268 = vmatprep.mubr.f32.mxu0 0.0
    %269 = vmatmul.mubr.f32.gmra.mrb[0].mxu0 %v135
    %v270 = vpop.f32.mrb[0].mxu0
    %v271 = vadd.f32 0.0, %v270
    %v272 = vpop.f32.mrb[0].mxu0
    %273 = vmatprep.mubr.f32.mxu0 0.0
    %274 = vmatmul.mubr.f32.gmra.mrb[0].mxu0 %v138
    %v275 = vpop.f32.mrb[0].mxu0
    %v276 = vadd.f32 0.0, %v275
    %v277 = vpop.f32.mrb[0].mxu0
    %278 = vmatprep.mubr.f32.mxu0 0.0
    %279 = vmatmul.mubr.f32.gmra.mrb[0].mxu0 %v141
    %v280 = vpop.f32.mrb[0].mxu0
    %v281 = vadd.f32 0.0, %v280
    %v282 = vpop.f32.mrb[0].mxu0
    %283 = vmatprep.mubr.f32.mxu0 0.0
    %284 = vmatmul.mubr.f32.gmra.mrb[0].mxu0 %v144
    %v285 = vpop.f32.mrb[0].mxu0
    %v286 = vadd.f32 0.0, %v285
    %v287 = vpop.f32.mrb[0].mxu0
    %288 = vmatprep.mubr.f32.mxu0 0.0
    %289 = vmatmul.mubr.f32.gmra.mrb[0].mxu0 %v147
    %v290 = vpop.f32.mrb[0].mxu0
    %v291 = vadd.f32 0.0, %v290
    %v292 = vpop.f32.mrb[0].mxu0
    %293 = vdwg.mxu0
    %v294 = vadd.f32 %v84, %v216
    %v295 = vadd.f32 %v85, %v221
    %v296 = vadd.f32 %v86, %v226
    %v297 = vadd.f32 %v87, %v231
    %v298 = vadd.f32 %v88, %v236
    %v299 = vadd.f32 %v89, %v241
    %v300 = vadd.f32 %v90, %v246
    %v301 = vadd.f32 %v91, %v251
    %v302 = vadd.f32 %v92, %v256
    %v303 = vadd.f32 %v93, %v261
    %v304 = vadd.f32 %v94, %v266
    %v305 = vadd.f32 %v95, %v271
    %v306 = vadd.f32 %v96, %v276
    %v307 = vadd.f32 %v97, %v281
    %v308 = vadd.f32 %v98, %v286
    %v309 = vadd.f32 %v99, %v291
    %310 = vst [vmem:[#allocation2] sm:$0xff] %v294
    %311 = vst [vmem:[#allocation2 + $0x8] sm:$0xff] %v295
    %312 = vst [vmem:[#allocation2 + $0x10] sm:$0xff] %v296
    %313 = vst [vmem:[#allocation2 + $0x18] sm:$0xff] %v297
    %314 = vst [vmem:[#allocation2 + $0x20] sm:$0xff] %v298
    %315 = vst [vmem:[#allocation2 + $0x28] sm:$0xff] %v299
    %316 = vst [vmem:[#allocation2 + $0x30] sm:$0xff] %v300
    %317 = vst [vmem:[#allocation2 + $0x38] sm:$0xff] %v301
    %318 = vst [vmem:[#allocation2 + $0x40] sm:$0xff] %v302
    %319 = vst [vmem:[#allocation2 + $0x48] sm:$0xff] %v303
    %320 = vst [vmem:[#allocation2 + $0x50] sm:$0xff] %v304
    %321 = vst [vmem:[#allocation2 + $0x58] sm:$0xff] %v305
    %322 = vst [vmem:[#allocation2 + $0x60] sm:$0xff] %v306
    %323 = vst [vmem:[#allocation2 + $0x68] sm:$0xff] %v307
    %324 = vst [vmem:[#allocation2 + $0x70] sm:$0xff] %v308
    %325 = vst [vmem:[#allocation2 + $0x78] sm:$0xff] %v309
    %v326 = vld [vmem:[#allocation3] sm:$0xff]
    %v327 = vld [vmem:[#allocation3 + $0x8] sm:$0xff]
    %v328 = vld [vmem:[#allocation3 + $0x10] sm:$0xff]
    %v329 = vld [vmem:[#allocation3 + $0x18] sm:$0xff]
    %v330 = vld [vmem:[#allocation3 + $0x20] sm:$0xff]
    %v331 = vld [vmem:[#allocation3 + $0x28] sm:$0xff]
    %v332 = vld [vmem:[#allocation3 + $0x30] sm:$0xff]
    %v333 = vld [vmem:[#allocation3 + $0x38] sm:$0xff]
    %v334 = vld [vmem:[#allocation3 + $0x40] sm:$0xff]
    %v335 = vld [vmem:[#allocation3 + $0x48] sm:$0xff]
    %v336 = vld [vmem:[#allocation3 + $0x50] sm:$0xff]
    %v337 = vld [vmem:[#allocation3 + $0x58] sm:$0xff]
    %v338 = vld [vmem:[#allocation3 + $0x60] sm:$0xff]
    %v339 = vld [vmem:[#allocation3 + $0x68] sm:$0xff]
    %v340 = vld [vmem:[#allocation3 + $0x70] sm:$0xff]
    %v341 = vld [vmem:[#allocation3 + $0x78] sm:$0xff]
    %v342 = vsel %vm100, %v67, 0.0
    %343 = vadd.xlane.f32.xlu0 %v342
    %v344 = vpop.xlane.xlu0 %343
    %v345 = vsel %vm100, %v68, 0.0
    %346 = vadd.xlane.f32.xlu0 %v345
    %v347 = vpop.xlane.xlu0 %346
    %v348 = vsel %vm100, %v69, 0.0
    %349 = vadd.xlane.f32.xlu0 %v348
    %v350 = vpop.xlane.xlu0 %349
    %v351 = vsel %vm100, %v70, 0.0
    %352 = vadd.xlane.f32.xlu0 %v351
    %v353 = vpop.xlane.xlu0 %352
    %v354 = vsel %vm100, %v71, 0.0
    %355 = vadd.xlane.f32.xlu0 %v354
    %v356 = vpop.xlane.xlu0 %355
    %v357 = vsel %vm100, %v72, 0.0
    %358 = vadd.xlane.f32.xlu0 %v357
    %v359 = vpop.xlane.xlu0 %358
    %v360 = vsel %vm100, %v73, 0.0
    %361 = vadd.xlane.f32.xlu0 %v360
    %v362 = vpop.xlane.xlu0 %361
    %v363 = vsel %vm100, %v74, 0.0
    %364 = vadd.xlane.f32.xlu0 %v363
    %v365 = vpop.xlane.xlu0 %364
    %v366 = vsel %vm100, %v75, 0.0
    %367 = vadd.xlane.f32.xlu0 %v366
    %v368 = vpop.xlane.xlu0 %367
    %v369 = vsel %vm100, %v76, 0.0
    %370 = vadd.xlane.f32.xlu0 %v369
    %v371 = vpop.xlane.xlu0 %370
    %v372 = vsel %vm100, %v77, 0.0
    %373 = vadd.xlane.f32.xlu0 %v372
    %v374 = vpop.xlane.xlu0 %373
    %v375 = vsel %vm100, %v78, 0.0
    %376 = vadd.xlane.f32.xlu0 %v375
    %v377 = vpop.xlane.xlu0 %376
    %v378 = vsel %vm100, %v79, 0.0
    %379 = vadd.xlane.f32.xlu0 %v378
    %v380 = vpop.xlane.xlu0 %379
    %v381 = vsel %vm100, %v80, 0.0
    %382 = vadd.xlane.f32.xlu0 %v381
    %v383 = vpop.xlane.xlu0 %382
    %v384 = vsel %vm100, %v81, 0.0
    %385 = vadd.xlane.f32.xlu0 %v384
    %v386 = vpop.xlane.xlu0 %385
    %v387 = vsel %vm100, %v82, 0.0
    %388 = vadd.xlane.f32.xlu0 %v387
    %v389 = vpop.xlane.xlu0 %388
    %v390 = vadd.f32 %v326, %v344
    %v391 = vadd.f32 %v327, %v347
    %v392 = vadd.f32 %v328, %v350
    %v393 = vadd.f32 %v329, %v353
    %v394 = vadd.f32 %v330, %v356
    %v395 = vadd.f32 %v331, %v359
    %v396 = vadd.f32 %v332, %v362
    %v397 = vadd.f32 %v333, %v365
    %v398 = vadd.f32 %v334, %v368
    %v399 = vadd.f32 %v335, %v371
    %v400 = vadd.f32 %v336, %v374
    %v401 = vadd.f32 %v337, %v377
    %v402 = vadd.f32 %v338, %v380
    %v403 = vadd.f32 %v339, %v383
    %v404 = vadd.f32 %v340, %v386
    %v405 = vadd.f32 %v341, %v389
    %vm406 = vcmask 7168
    %407 = vst.msk [vmem:[#allocation3] sm:$0xff] %vm406, %v390
    %408 = vst.msk [vmem:[#allocation3 + $0x8] sm:$0xff] %vm406, %v391
    %409 = vst.msk [vmem:[#allocation3 + $0x10] sm:$0xff] %vm406, %v392
    %410 = vst.msk [vmem:[#allocation3 + $0x18] sm:$0xff] %vm406, %v393
    %411 = vst.msk [vmem:[#allocation3 + $0x20] sm:$0xff] %vm406, %v394
    %412 = vst.msk [vmem:[#allocation3 + $0x28] sm:$0xff] %vm406, %v395
    %413 = vst.msk [vmem:[#allocation3 + $0x30] sm:$0xff] %vm406, %v396
    %414 = vst.msk [vmem:[#allocation3 + $0x38] sm:$0xff] %vm406, %v397
    %415 = vst.msk [vmem:[#allocation3 + $0x40] sm:$0xff] %vm406, %v398
    %416 = vst.msk [vmem:[#allocation3 + $0x48] sm:$0xff] %vm406, %v399
    %417 = vst.msk [vmem:[#allocation3 + $0x50] sm:$0xff] %vm406, %v400
    %418 = vst.msk [vmem:[#allocation3 + $0x58] sm:$0xff] %vm406, %v401
    %419 = vst.msk [vmem:[#allocation3 + $0x60] sm:$0xff] %vm406, %v402
    %420 = vst.msk [vmem:[#allocation3 + $0x68] sm:$0xff] %vm406, %v403
    %421 = vst.msk [vmem:[#allocation3 + $0x70] sm:$0xff] %vm406, %v404
    %422 = vst.msk [vmem:[#allocation3 + $0x78] sm:$0xff] %vm406, %v405
    %v423 = vld [vmem:[#allocation4] sm:$0xff]
    %v424 = vld [vmem:[#allocation4 + $0x8] sm:$0xff]
    %v425 = vld [vmem:[#allocation4 + $0x10] sm:$0xff]
    %v426 = vld [vmem:[#allocation4 + $0x18] sm:$0xff]
    %v427 = vld [vmem:[#allocation4 + $0x20] sm:$0xff]
    %v428 = vld [vmem:[#allocation4 + $0x28] sm:$0xff]
    %v429 = vld [vmem:[#allocation4 + $0x30] sm:$0xff]
    %v430 = vld [vmem:[#allocation4 + $0x38] sm:$0xff]
    %v431 = vld [vmem:[#allocation4 + $0x40] sm:$0xff]
    %v432 = vld [vmem:[#allocation4 + $0x48] sm:$0xff]
    %v433 = vld [vmem:[#allocation4 + $0x50] sm:$0xff]
    %v434 = vld [vmem:[#allocation4 + $0x58] sm:$0xff]
    %v435 = vld [vmem:[#allocation4 + $0x60] sm:$0xff]
    %v436 = vld [vmem:[#allocation4 + $0x68] sm:$0xff]
    %v437 = vld [vmem:[#allocation4 + $0x70] sm:$0xff]
    %v438 = vld [vmem:[#allocation4 + $0x78] sm:$0xff]
    %v439 = vmul.f32 %v67, %v67
    %v440 = vmul.f32 %v68, %v68
    %v441 = vmul.f32 %v69, %v69
    %v442 = vmul.f32 %v70, %v70
    %v443 = vmul.f32 %v71, %v71
    %v444 = vmul.f32 %v72, %v72
    %v445 = vmul.f32 %v73, %v73
    %v446 = vmul.f32 %v74, %v74
    %v447 = vmul.f32 %v75, %v75
    %v448 = vmul.f32 %v76, %v76
    %v449 = vmul.f32 %v77, %v77
    %v450 = vmul.f32 %v78, %v78
    %v451 = vmul.f32 %v79, %v79
    %v452 = vmul.f32 %v80, %v80
    %v453 = vmul.f32 %v81, %v81
    %v454 = vmul.f32 %v82, %v82
    %v455 = vsel %vm100, %v439, 0.0
    %456 = vadd.xlane.f32.xlu0 %v455
    %v457 = vpop.xlane.xlu0 %456
    %v458 = vsel %vm100, %v440, 0.0
    %459 = vadd.xlane.f32.xlu0 %v458
    %v460 = vpop.xlane.xlu0 %459
    %v461 = vsel %vm100, %v441, 0.0
    %462 = vadd.xlane.f32.xlu0 %v461
    %v463 = vpop.xlane.xlu0 %462
    %v464 = vsel %vm100, %v442, 0.0
    %465 = vadd.xlane.f32.xlu0 %v464
    %v466 = vpop.xlane.xlu0 %465
    %v467 = vsel %vm100, %v443, 0.0
    %468 = vadd.xlane.f32.xlu0 %v467
    %v469 = vpop.xlane.xlu0 %468
    %v470 = vsel %vm100, %v444, 0.0
    %471 = vadd.xlane.f32.xlu0 %v470
    %v472 = vpop.xlane.xlu0 %471
    %v473 = vsel %vm100, %v445, 0.0
    %474 = vadd.xlane.f32.xlu0 %v473
    %v475 = vpop.xlane.xlu0 %474
    %v476 = vsel %vm100, %v446, 0.0
    %477 = vadd.xlane.f32.xlu0 %v476
    %v478 = vpop.xlane.xlu0 %477
    %v479 = vsel %vm100, %v447, 0.0
    %480 = vadd.xlane.f32.xlu0 %v479
    %v481 = vpop.xlane.xlu0 %480
    %v482 = vsel %vm100, %v448, 0.0
    %483 = vadd.xlane.f32.xlu0 %v482
    %v484 = vpop.xlane.xlu0 %483
    %v485 = vsel %vm100, %v449, 0.0
    %486 = vadd.xlane.f32.xlu0 %v485
    %v487 = vpop.xlane.xlu0 %486
    %v488 = vsel %vm100, %v450, 0.0
    %489 = vadd.xlane.f32.xlu0 %v488
    %v490 = vpop.xlane.xlu0 %489
    %v491 = vsel %vm100, %v451, 0.0
    %492 = vadd.xlane.f32.xlu0 %v491
    %v493 = vpop.xlane.xlu0 %492
    %v494 = vsel %vm100, %v452, 0.0
    %495 = vadd.xlane.f32.xlu0 %v494
    %v496 = vpop.xlane.xlu0 %495
    %v497 = vsel %vm100, %v453, 0.0
    %498 = vadd.xlane.f32.xlu0 %v497
    %v499 = vpop.xlane.xlu0 %498
    %v500 = vsel %vm100, %v454, 0.0
    %501 = vadd.xlane.f32.xlu0 %v500
    %v502 = vpop.xlane.xlu0 %501
    %v503 = vadd.f32 %v423, %v457
    %v504 = vadd.f32 %v424, %v460
    %v505 = vadd.f32 %v425, %v463
    %v506 = vadd.f32 %v426, %v466
    %v507 = vadd.f32 %v427, %v469
    %v508 = vadd.f32 %v428, %v472
    %v509 = vadd.f32 %v429, %v475
    %v510 = vadd.f32 %v430, %v478
    %v511 = vadd.f32 %v431, %v481
    %v512 = vadd.f32 %v432, %v484
    %v513 = vadd.f32 %v433, %v487
    %v514 = vadd.f32 %v434, %v490
    %v515 = vadd.f32 %v435, %v493
    %v516 = vadd.f32 %v436, %v496
    %v517 = vadd.f32 %v437, %v499
    %v518 = vadd.f32 %v438, %v502
    %519 = vst.msk [vmem:[#allocation4] sm:$0xff] %vm406, %v503
    %520 = vst.msk [vmem:[#allocation4 + $0x8] sm:$0xff] %vm406, %v504
    %521 = vst.msk [vmem:[#allocation4 + $0x10] sm:$0xff] %vm406, %v505
    %522 = vst.msk [vmem:[#allocation4 + $0x18] sm:$0xff] %vm406, %v506
    %523 = vst.msk [vmem:[#allocation4 + $0x20] sm:$0xff] %vm406, %v507
    %524 = vst.msk [vmem:[#allocation4 + $0x28] sm:$0xff] %vm406, %v508
    %525 = vst.msk [vmem:[#allocation4 + $0x30] sm:$0xff] %vm406, %v509
    %526 = vst.msk [vmem:[#allocation4 + $0x38] sm:$0xff] %vm406, %v510
    %527 = vst.msk [vmem:[#allocation4 + $0x40] sm:$0xff] %vm406, %v511
    %528 = vst.msk [vmem:[#allocation4 + $0x48] sm:$0xff] %vm406, %v512
    %529 = vst.msk [vmem:[#allocation4 + $0x50] sm:$0xff] %vm406, %v513
    %530 = vst.msk [vmem:[#allocation4 + $0x58] sm:$0xff] %vm406, %v514
    %531 = vst.msk [vmem:[#allocation4 + $0x60] sm:$0xff] %vm406, %v515
    %532 = vst.msk [vmem:[#allocation4 + $0x68] sm:$0xff] %vm406, %v516
    %533 = vst.msk [vmem:[#allocation4 + $0x70] sm:$0xff] %vm406, %v517
    %534 = vst.msk [vmem:[#allocation4 + $0x78] sm:$0xff] %vm406, %v518
    %v535 = vld [vmem:[#allocation5] sm:$0x1]
    %v536 = vrot.slane %v83, 4
    %v537 = vadd.f32 %v83, %v536
    %v538 = vrot.slane %v537, 2
    %v539 = vadd.f32 %v537, %v538
    %v540 = vrot.slane %v539, 1
    %v541 = vadd.f32 %v539, %v540
    %v542 = vadd.f32 %v535, %v541
    %543 = vst [vmem:[#allocation5] sm:$0x1] %v542
    %v544 = vld [vmem:[#allocation6] sm:$0x1]
    %v545 = vmul.f32 %v83, %v83
    %v546 = vrot.slane %v545, 4
    %v547 = vadd.f32 %v545, %v546
    %v548 = vrot.slane %v547, 2
    %v549 = vadd.f32 %v547, %v548
    %v550 = vrot.slane %v549, 1
    %v551 = vadd.f32 %v549, %v550
    %v552 = vadd.f32 %v544, %v551
    %553 = vst [vmem:[#allocation6] sm:$0x1] %v552
    // Predicated region
    $region14: #{tpu_custom_call.1} parent=1 // pred_check
      %p554 = pneg %p12
    $region15: #{tpu_custom_call.1} parent=1 // pred_check_branch
      %556 = sbr.rel (%p554) target = $region17
    $region16: #{tpu_custom_call.1} parent=1 // pred_region
      %v557 = vld [vmem:[#allocation4] sm:$0xff]
      %v558 = vld [vmem:[#allocation4 + $0x8] sm:$0xff]
      %v559 = vld [vmem:[#allocation4 + $0x10] sm:$0xff]
      %v560 = vld [vmem:[#allocation4 + $0x18] sm:$0xff]
      %v561 = vld [vmem:[#allocation4 + $0x20] sm:$0xff]
      %v562 = vld [vmem:[#allocation4 + $0x28] sm:$0xff]
      %v563 = vld [vmem:[#allocation4 + $0x30] sm:$0xff]
      %v564 = vld [vmem:[#allocation4 + $0x38] sm:$0xff]
      %v565 = vld [vmem:[#allocation4 + $0x40] sm:$0xff]
      %v566 = vld [vmem:[#allocation4 + $0x48] sm:$0xff]
      %v567 = vld [vmem:[#allocation4 + $0x50] sm:$0xff]
      %v568 = vld [vmem:[#allocation4 + $0x58] sm:$0xff]
      %v569 = vld [vmem:[#allocation4 + $0x60] sm:$0xff]
      %v570 = vld [vmem:[#allocation4 + $0x68] sm:$0xff]
      %v571 = vld [vmem:[#allocation4 + $0x70] sm:$0xff]
      %v572 = vld [vmem:[#allocation4 + $0x78] sm:$0xff]
      %v573 = vmax.f32 %v557, 1e-24
      %v574 = vmax.f32 %v558, 1e-24
      %v575 = vmax.f32 %v559, 1e-24
      %v576 = vmax.f32 %v560, 1e-24
      %v577 = vmax.f32 %v561, 1e-24
      %v578 = vmax.f32 %v562, 1e-24
      %v579 = vmax.f32 %v563, 1e-24
      %v580 = vmax.f32 %v564, 1e-24
      %v581 = vmax.f32 %v565, 1e-24
      %v582 = vmax.f32 %v566, 1e-24
      %v583 = vmax.f32 %v567, 1e-24
      %v584 = vmax.f32 %v568, 1e-24
      %v585 = vmax.f32 %v569, 1e-24
      %v586 = vmax.f32 %v570, 1e-24
      %v587 = vmax.f32 %v571, 1e-24
      %v588 = vmax.f32 %v572, 1e-24
      %v589 = vrsqrt.pop %v573
      %v590 = vrsqrt.pop %v574
      %v591 = vrsqrt.pop %v575
      %v592 = vrsqrt.pop %v576
      %v593 = vrsqrt.pop %v577
      %v594 = vrsqrt.pop %v578
      %v595 = vrsqrt.pop %v579
      %v596 = vrsqrt.pop %v580
      %v597 = vrsqrt.pop %v581
      %v598 = vrsqrt.pop %v582
      %v599 = vrsqrt.pop %v583
      %v600 = vrsqrt.pop %v584
      %v601 = vrsqrt.pop %v585
      %v602 = vrsqrt.pop %v586
      %v603 = vrsqrt.pop %v587
      %v604 = vrsqrt.pop %v588
      %v605 = vld [vmem:[#allocation6] sm:$0x1]
      %v606 = vmax.f32 %v605, 1e-24
      %v607 = vrsqrt.pop %v606
      %v608 = vld [vmem:[#allocation3] sm:$0xff]
      %v609 = vld [vmem:[#allocation3 + $0x8] sm:$0xff]
      %v610 = vld [vmem:[#allocation3 + $0x10] sm:$0xff]
      %v611 = vld [vmem:[#allocation3 + $0x18] sm:$0xff]
      %v612 = vld [vmem:[#allocation3 + $0x20] sm:$0xff]
      %v613 = vld [vmem:[#allocation3 + $0x28] sm:$0xff]
      %v614 = vld [vmem:[#allocation3 + $0x30] sm:$0xff]
      %v615 = vld [vmem:[#allocation3 + $0x38] sm:$0xff]
      %v616 = vld [vmem:[#allocation3 + $0x40] sm:$0xff]
      %v617 = vld [vmem:[#allocation3 + $0x48] sm:$0xff]
      %v618 = vld [vmem:[#allocation3 + $0x50] sm:$0xff]
      %v619 = vld [vmem:[#allocation3 + $0x58] sm:$0xff]
      %v620 = vld [vmem:[#allocation3 + $0x60] sm:$0xff]
      %v621 = vld [vmem:[#allocation3 + $0x68] sm:$0xff]
      %v622 = vld [vmem:[#allocation3 + $0x70] sm:$0xff]
      %v623 = vld [vmem:[#allocation3 + $0x78] sm:$0xff]
      %v624 = vmul.f32 %v608, %v589
      %v625 = vmul.f32 %v609, %v590
      %v626 = vmul.f32 %v610, %v591
      %v627 = vmul.f32 %v611, %v592
      %v628 = vmul.f32 %v612, %v593
      %v629 = vmul.f32 %v613, %v594
      %v630 = vmul.f32 %v614, %v595
      %v631 = vmul.f32 %v615, %v596
      %v632 = vmul.f32 %v616, %v597
      %v633 = vmul.f32 %v617, %v598
      %v634 = vmul.f32 %v618, %v599
      %v635 = vmul.f32 %v619, %v600
      %v636 = vmul.f32 %v620, %v601
      %v637 = vmul.f32 %v621, %v602
      %v638 = vmul.f32 %v622, %v603
      %v639 = vmul.f32 %v623, %v604
      %v640 = vld [vmem:[#allocation5] sm:$0x1]
      %v641 = vmul.f32 %v640, %v607
      %v642 = vmul.f32 %v641, 0.125
      %v643 = vld [vmem:[#allocation2] sm:$0xff]
      %v644 = vld [vmem:[#allocation2 + $0x8] sm:$0xff]
      %v645 = vld [vmem:[#allocation2 + $0x10] sm:$0xff]
      %v646 = vld [vmem:[#allocation2 + $0x18] sm:$0xff]
      %v647 = vld [vmem:[#allocation2 + $0x20] sm:$0xff]
      %v648 = vld [vmem:[#allocation2 + $0x28] sm:$0xff]
      %v649 = vld [vmem:[#allocation2 + $0x30] sm:$0xff]
      %v650 = vld [vmem:[#allocation2 + $0x38] sm:$0xff]
      %v651 = vld [vmem:[#allocation2 + $0x40] sm:$0xff]
      %v652 = vld [vmem:[#allocation2 + $0x48] sm:$0xff]
      %v653 = vld [vmem:[#allocation2 + $0x50] sm:$0xff]
      %v654 = vld [vmem:[#allocation2 + $0x58] sm:$0xff]
      %v655 = vld [vmem:[#allocation2 + $0x60] sm:$0xff]
      %v656 = vld [vmem:[#allocation2 + $0x68] sm:$0xff]
      %v657 = vld [vmem:[#allocation2 + $0x70] sm:$0xff]
      %v658 = vld [vmem:[#allocation2 + $0x78] sm:$0xff]
      %660 = vset.pattern.permute.xlu0 0
      %661 = vperm.xlu0 %660, %v589
      %v662 = vpop.permute.xlu0 %661
      %665 = vset.pattern.permute.xlu0 0
      %666 = vperm.xlu0 %665, %v590
      %v667 = vpop.permute.xlu0 %666
      %670 = vset.pattern.permute.xlu0 0
      %671 = vperm.xlu0 %670, %v591
      %v672 = vpop.permute.xlu0 %671
      %675 = vset.pattern.permute.xlu0 0
      %676 = vperm.xlu0 %675, %v592
      %v677 = vpop.permute.xlu0 %676
      %680 = vset.pattern.permute.xlu0 0
      %681 = vperm.xlu0 %680, %v593
      %v682 = vpop.permute.xlu0 %681
      %685 = vset.pattern.permute.xlu0 0
      %686 = vperm.xlu0 %685, %v594
      %v687 = vpop.permute.xlu0 %686
      %690 = vset.pattern.permute.xlu0 0
      %691 = vperm.xlu0 %690, %v595
      %v692 = vpop.permute.xlu0 %691
      %695 = vset.pattern.permute.xlu0 0
      %696 = vperm.xlu0 %695, %v596
      %v697 = vpop.permute.xlu0 %696
      %700 = vset.pattern.permute.xlu0 0
      %701 = vperm.xlu0 %700, %v597
      %v702 = vpop.permute.xlu0 %701
      %705 = vset.pattern.permute.xlu0 0
      %706 = vperm.xlu0 %705, %v598
      %v707 = vpop.permute.xlu0 %706
      %710 = vset.pattern.permute.xlu0 0
      %711 = vperm.xlu0 %710, %v599
      %v712 = vpop.permute.xlu0 %711
      %715 = vset.pattern.permute.xlu0 0
      %716 = vperm.xlu0 %715, %v600
      %v717 = vpop.permute.xlu0 %716
      %720 = vset.pattern.permute.xlu0 0
      %721 = vperm.xlu0 %720, %v601
      %v722 = vpop.permute.xlu0 %721
      %725 = vset.pattern.permute.xlu0 0
      %726 = vperm.xlu0 %725, %v602
      %v727 = vpop.permute.xlu0 %726
      %730 = vset.pattern.permute.xlu0 0
      %731 = vperm.xlu0 %730, %v603
      %v732 = vpop.permute.xlu0 %731
      %735 = vset.pattern.permute.xlu0 0
      %736 = vperm.xlu0 %735, %v604
      %v737 = vpop.permute.xlu0 %736
      %v739 = vmul.f32 %v643, %v662
      %v740 = vmul.f32 %v644, %v667
      %v741 = vmul.f32 %v645, %v672
      %v742 = vmul.f32 %v646, %v677
      %v743 = vmul.f32 %v647, %v682
      %v744 = vmul.f32 %v648, %v687
      %v745 = vmul.f32 %v649, %v692
      %v746 = vmul.f32 %v650, %v697
      %v747 = vmul.f32 %v651, %v702
      %v748 = vmul.f32 %v652, %v707
      %v749 = vmul.f32 %v653, %v712
      %v750 = vmul.f32 %v654, %v717
      %v751 = vmul.f32 %v655, %v722
      %v752 = vmul.f32 %v656, %v727
      %v753 = vmul.f32 %v657, %v732
      %v754 = vmul.f32 %v658, %v737
      %v756 = vlaneseq
      %v757 = vshrl.u32 %v756, 7
      %v758 = vsub.s32 0, %v757
      %v759 = vrot.slane %v607, %v758
      %v761 = vmul.f32 %v739, %v759
      %v762 = vmul.f32 %v740, %v759
      %v763 = vmul.f32 %v741, %v759
      %v764 = vmul.f32 %v742, %v759
      %v765 = vmul.f32 %v743, %v759
      %v766 = vmul.f32 %v744, %v759
      %v767 = vmul.f32 %v745, %v759
      %v768 = vmul.f32 %v746, %v759
      %v769 = vmul.f32 %v747, %v759
      %v770 = vmul.f32 %v748, %v759
      %v771 = vmul.f32 %v749, %v759
      %v772 = vmul.f32 %v750, %v759
      %v773 = vmul.f32 %v751, %v759
      %v774 = vmul.f32 %v752, %v759
      %v775 = vmul.f32 %v753, %v759
      %v776 = vmul.f32 %v754, %v759
      %778 = vset.pattern.permute.xlu0 0
      %779 = vperm.xlu0 %778, %v624
      %v780 = vpop.permute.xlu0 %779
      %783 = vset.pattern.permute.xlu0 0
      %784 = vperm.xlu0 %783, %v625
      %v785 = vpop.permute.xlu0 %784
      %788 = vset.pattern.permute.xlu0 0
      %789 = vperm.xlu0 %788, %v626
      %v790 = vpop.permute.xlu0 %789
      %793 = vset.pattern.permute.xlu0 0
      %794 = vperm.xlu0 %793, %v627
      %v795 = vpop.permute.xlu0 %794
      %798 = vset.pattern.permute.xlu0 0
      %799 = vperm.xlu0 %798, %v628
      %v800 = vpop.permute.xlu0 %799
      %803 = vset.pattern.permute.xlu0 0
      %804 = vperm.xlu0 %803, %v629
      %v805 = vpop.permute.xlu0 %804
      %808 = vset.pattern.permute.xlu0 0
      %809 = vperm.xlu0 %808, %v630
      %v810 = vpop.permute.xlu0 %809
      %813 = vset.pattern.permute.xlu0 0
      %814 = vperm.xlu0 %813, %v631
      %v815 = vpop.permute.xlu0 %814
      %818 = vset.pattern.permute.xlu0 0
      %819 = vperm.xlu0 %818, %v632
      %v820 = vpop.permute.xlu0 %819
      %823 = vset.pattern.permute.xlu0 0
      %824 = vperm.xlu0 %823, %v633
      %v825 = vpop.permute.xlu0 %824
      %828 = vset.pattern.permute.xlu0 0
      %829 = vperm.xlu0 %828, %v634
      %v830 = vpop.permute.xlu0 %829
      %833 = vset.pattern.permute.xlu0 0
      %834 = vperm.xlu0 %833, %v635
      %v835 = vpop.permute.xlu0 %834
      %838 = vset.pattern.permute.xlu0 0
      %839 = vperm.xlu0 %838, %v636
      %v840 = vpop.permute.xlu0 %839
      %843 = vset.pattern.permute.xlu0 0
      %844 = vperm.xlu0 %843, %v637
      %v845 = vpop.permute.xlu0 %844
      %848 = vset.pattern.permute.xlu0 0
      %849 = vperm.xlu0 %848, %v638
      %v850 = vpop.permute.xlu0 %849
      %853 = vset.pattern.permute.xlu0 0
      %854 = vperm.xlu0 %853, %v639
      %v855 = vpop.permute.xlu0 %854
      %v858 = vlaneseq
      %v859 = vshrl.u32 %v858, 7
      %v860 = vsub.s32 0, %v859
      %v861 = vrot.slane %v642, %v860
      %v863 = vmul.f32 %v780, %v861
      %v864 = vmul.f32 %v785, %v861
      %v865 = vmul.f32 %v790, %v861
      %v866 = vmul.f32 %v795, %v861
      %v867 = vmul.f32 %v800, %v861
      %v868 = vmul.f32 %v805, %v861
      %v869 = vmul.f32 %v810, %v861
      %v870 = vmul.f32 %v815, %v861
      %v871 = vmul.f32 %v820, %v861
      %v872 = vmul.f32 %v825, %v861
      %v873 = vmul.f32 %v830, %v861
      %v874 = vmul.f32 %v835, %v861
      %v875 = vmul.f32 %v840, %v861
      %v876 = vmul.f32 %v845, %v861
      %v877 = vmul.f32 %v850, %v861
      %v878 = vmul.f32 %v855, %v861
      %v879 = vsub.f32 %v761, %v863
      %v880 = vsub.f32 %v762, %v864
      %v881 = vsub.f32 %v763, %v865
      %v882 = vsub.f32 %v764, %v866
      %v883 = vsub.f32 %v765, %v867
      %v884 = vsub.f32 %v766, %v868
      %v885 = vsub.f32 %v767, %v869
      %v886 = vsub.f32 %v768, %v870
      %v887 = vsub.f32 %v769, %v871
      %v888 = vsub.f32 %v770, %v872
      %v889 = vsub.f32 %v771, %v873
      %v890 = vsub.f32 %v772, %v874
      %v891 = vsub.f32 %v773, %v875
      %v892 = vsub.f32 %v774, %v876
      %v893 = vsub.f32 %v775, %v877
      %v894 = vsub.f32 %v776, %v878
      %v895 = vlaneseq
      %v896 = vshrl.u32 %v895, 7
      %v897 = vadd.s32 %v896, 8
      %v898 = vadd.s32 %v896, 16
      %v899 = vadd.s32 %v896, 24
      %v900 = vadd.s32 %v896, 32
      %v901 = vadd.s32 %v896, 40
      %v902 = vadd.s32 %v896, 48
      %v903 = vadd.s32 %v896, 56
      %v904 = vadd.s32 %v896, 64
      %v905 = vadd.s32 %v896, 72
      %v906 = vadd.s32 %v896, 80
      %v907 = vadd.s32 %v896, 88
      %v908 = vadd.s32 %v896, 96
      %v909 = vadd.s32 %v896, 104
      %v910 = vadd.s32 %v896, 112
      %v911 = vadd.s32 %v896, 120
      %v912 = vlaneseq
      %v913 = vand.u32 %v912, 127
      %s914 = smul.u32 0, 128
      %v915 = vstv %s914
      %v916 = vadd.s32 %v913, %v915
      %vm917 = vcmp.eq.s32.totalorder %v896, %v916
      %vm918 = vcmp.eq.s32.totalorder %v897, %v916
      %vm919 = vcmp.eq.s32.totalorder %v898, %v916
      %vm920 = vcmp.eq.s32.totalorder %v899, %v916
      %vm921 = vcmp.eq.s32.totalorder %v900, %v916
      %vm922 = vcmp.eq.s32.totalorder %v901, %v916
      %vm923 = vcmp.eq.s32.totalorder %v902, %v916
      %vm924 = vcmp.eq.s32.totalorder %v903, %v916
      %vm925 = vcmp.eq.s32.totalorder %v904, %v916
      %vm926 = vcmp.eq.s32.totalorder %v905, %v916
      %vm927 = vcmp.eq.s32.totalorder %v906, %v916
      %vm928 = vcmp.eq.s32.totalorder %v907, %v916
      %vm929 = vcmp.eq.s32.totalorder %v908, %v916
      %vm930 = vcmp.eq.s32.totalorder %v909, %v916
      %vm931 = vcmp.eq.s32.totalorder %v910, %v916
      %vm932 = vcmp.eq.s32.totalorder %v911, %v916
      %v933 = vsel %vm917, %v879, 0.0
      %v934 = vsel %vm918, %v880, 0.0
      %v935 = vsel %vm919, %v881, 0.0
      %v936 = vsel %vm920, %v882, 0.0
      %v937 = vsel %vm921, %v883, 0.0
      %v938 = vsel %vm922, %v884, 0.0
      %v939 = vsel %vm923, %v885, 0.0
      %v940 = vsel %vm924, %v886, 0.0
      %v941 = vsel %vm925, %v887, 0.0
      %v942 = vsel %vm926, %v888, 0.0
      %v943 = vsel %vm927, %v889, 0.0
      %v944 = vsel %vm928, %v890, 0.0
      %v945 = vsel %vm929, %v891, 0.0
      %v946 = vsel %vm930, %v892, 0.0
      %v947 = vsel %vm931, %v893, 0.0
      %v948 = vsel %vm932, %v894, 0.0
      %v949 = vadd.f32 %v933, %v934
      %v950 = vadd.f32 %v949, %v935
      %v951 = vadd.f32 %v950, %v936
      %v952 = vadd.f32 %v951, %v937
      %v953 = vadd.f32 %v952, %v938
      %v954 = vadd.f32 %v953, %v939
      %v955 = vadd.f32 %v954, %v940
      %v956 = vadd.f32 %v955, %v941
      %v957 = vadd.f32 %v956, %v942
      %v958 = vadd.f32 %v957, %v943
      %v959 = vadd.f32 %v958, %v944
      %v960 = vadd.f32 %v959, %v945
      %v961 = vadd.f32 %v960, %v946
      %v962 = vadd.f32 %v961, %v947
      %v963 = vadd.f32 %v962, %v948
      %964 = vadd.xlane.f32.xlu0 %v963
      %v965 = vpop.xlane.xlu0 %964
      %v966 = vrot.slane %v965, 4
      %v967 = vadd.f32 %v965, %v966
      %v968 = vrot.slane %v967, 2
      %v969 = vadd.f32 %v967, %v968
      %v970 = vrot.slane %v969, 1
      %v971 = vadd.f32 %v969, %v970
      %s972 = vtos %v971
      %v973 = vmul.f32 %v879, %v879
      %v974 = vmul.f32 %v880, %v880
      %v975 = vmul.f32 %v881, %v881
      %v976 = vmul.f32 %v882, %v882
      %v977 = vmul.f32 %v883, %v883
      %v978 = vmul.f32 %v884, %v884
      %v979 = vmul.f32 %v885, %v885
      %v980 = vmul.f32 %v886, %v886
      %v981 = vmul.f32 %v887, %v887
      %v982 = vmul.f32 %v888, %v888
      %v983 = vmul.f32 %v889, %v889
      %v984 = vmul.f32 %v890, %v890
      %v985 = vmul.f32 %v891, %v891
      %v986 = vmul.f32 %v892, %v892
      %v987 = vmul.f32 %v893, %v893
      %v988 = vmul.f32 %v894, %v894
      %v989 = vadd.f32 %v973, %v974
      %v990 = vadd.f32 %v989, %v975
      %v991 = vadd.f32 %v990, %v976
      %v992 = vadd.f32 %v991, %v977
      %v993 = vadd.f32 %v992, %v978
      %v994 = vadd.f32 %v993, %v979
      %v995 = vadd.f32 %v994, %v980
      %v996 = vadd.f32 %v995, %v981
      %v997 = vadd.f32 %v996, %v982
      %v998 = vadd.f32 %v997, %v983
      %v999 = vadd.f32 %v998, %v984
      %v1000 = vadd.f32 %v999, %v985
      %v1001 = vadd.f32 %v1000, %v986
      %v1002 = vadd.f32 %v1001, %v987
      %v1003 = vadd.f32 %v1002, %v988
      %1004 = vadd.xlane.f32.xlu0 %v1003
      %v1005 = vpop.xlane.xlu0 %1004
      %v1006 = vrot.slane %v1005, 4
      %v1007 = vadd.f32 %v1005, %v1006
      %v1008 = vrot.slane %v1007, 2
      %v1009 = vadd.f32 %v1007, %v1008
      %v1010 = vrot.slane %v1009, 1
      %v1011 = vadd.f32 %v1009, %v1010
      %s1012 = vtos %v1011
      %s1013 = smul.f32 %s972, 2.0
      %s1014 = ssub.f32 %s1012, %s1013
      %v1015 = vstv %s1014
      %1016 = vst [vmem:[#allocation7] sm:$0xff] %v1015
    $region17: #{tpu_custom_call.1} parent=1 // pred_fallthru
      _
    // Predicated region
    $region18: #{tpu_custom_call.1} parent=1 // pred_check
      _
    $region19: #{tpu_custom_call.1} parent=1 // pred_check_branch
      %1018 = sbr.rel (0) target = $region21
    $region20: #{tpu_custom_call.1} parent=1 // pred_region
      %s1020 = ssub.s32 128, 128
      %1021 = vsyncadd [#allocation8], %s1020
      %s1023 = sshll.u32 [#allocation7], 4
      %s1024 = int_to_ptr.vmem [resolvable:$true] %s1023
      %1026 = dma.vmem_to_hbm [thread:$0]  %s1024, 128, %s2, [#allocation8]
    $region21: #{tpu_custom_call.1} parent=1 // pred_fallthru
      _
    // Predicated region
    $region22: #{tpu_custom_call.1} parent=1 // pred_check
      _
    $region23: #{tpu_custom_call.1} parent=1 // pred_check_branch
      %1028 = sbr.rel (0) target = $region25
    $region24: #{tpu_custom_call.1} parent=1 // pred_region
      %1029 = dma.done [#allocation8], 128
    $region25: #{tpu_custom_call.1} parent=1 // pred_fallthru
      _
    %1030 = vsyncpa [#allocation8], 1

</llo_original>
